<compile_context>
chip_gen: v6e
topology: v6e:2x2x1
jax: 0.10.0
libtpu: 0.0.40
codegen_flags: <defaults>
</compile_context>

<pallas_src>
import functools

import jax
import jax.numpy as jnp
from jax.experimental import pallas as pl
from jax.experimental.pallas import tpu as pltpu


def _ce_label_smooth_kernel(x_ref, xt_ref, o_ref,
                            m_ref, l_ref, sx_ref,
                            *, epsilon, num_classes):
    """One (batch_block, class_block) grid step of label-smoothed cross entropy.

    x_ref  : (TB, TC) logits tile (any float dtype, upcast to f32 in-kernel)
    xt_ref : (TB, 1)  f32 gathered target logits (resident across the class loop)
    o_ref  : (1, 1, 128) per-batch-block partial loss (written on last class tile)
    scratch (VMEM f32, persistent across the class loop):
      m_ref (TB,1) running max | l_ref (TB,1) running sum exp(x-m)
      sx_ref (TB,1) running sum of raw logits (only touched when epsilon != 0)
    """
    k = pl.program_id(1)
    nk = pl.num_programs(1)

    @pl.when(k == 0)
    def _init():
        m_ref[...] = jnp.full(m_ref.shape, -jnp.inf, m_ref.dtype)
        l_ref[...] = jnp.zeros(l_ref.shape, l_ref.dtype)
        if epsilon != 0.0:                       # static Python branch (eps is a float)
            sx_ref[...] = jnp.zeros(sx_ref.shape, sx_ref.dtype)

    x = x_ref[...].astype(jnp.float32)           # (TB, TC)

    # Online logsumexp update (numerically stable across class tiles).
    tile_max = jnp.max(x, axis=1, keepdims=True)                        # (TB, 1)
    m_new = jnp.maximum(m_ref[...], tile_max)
    alpha = jnp.exp(m_ref[...] - m_new)
    l_ref[...] = alpha * l_ref[...] + jnp.sum(jnp.exp(x - m_new), axis=1, keepdims=True)
    m_ref[...] = m_new

    if epsilon != 0.0:
        # Running sum of raw logits (for the uniform eps/K term).
        sx_ref[...] = sx_ref[...] + jnp.sum(x, axis=1, keepdims=True)

    @pl.when(k == nk - 1)
    def _finalize():
        log_z = m_ref[...] + jnp.log(l_ref[...])                        # (TB, 1)
        row_loss = -(1.0 - epsilon) * (xt_ref[...] - log_z)
        if epsilon != 0.0:
            row_loss = row_loss - (epsilon / num_classes) * (
                sx_ref[...] - num_classes * log_z)
        partial = jnp.sum(row_loss)              # scalar over this batch tile
        o_ref[...] = jnp.broadcast_to(partial, o_ref.shape)


def _pick_block(dim, target, align):
    """Largest b <= target with dim % b == 0 and b % align == 0 (else full dim)."""
    if dim <= target:
        return dim
    for b in range(int(target), 0, -1):
        if dim % b == 0 and b % align == 0:
            return b
    # TODO(synk): pad ragged batch/class dims wrapper-side instead of full-dim fallback.
    return dim


def _tpu_vmem_capacity_bytes():
    try:
        return int(pltpu.get_tpu_info().vmem_capacity_bytes)
    except Exception:
        return 64 * 1024 * 1024   # conservative default (v7x per-TC VMEM)


def cross_entropy_label_smooth(inputs, targets, *, num_classes, epsilon=0.05,
                               label_smooth=True, block_b=None, block_c=None):
    """inputs: (B, C) float logits (f32 or bf16), targets: (B,) int ids -> scalar f32 loss."""
    eps = float(epsilon) if label_smooth else 0.0
    B, C = inputs.shape
    assert C == num_classes

    itemsize = jnp.dtype(inputs.dtype).itemsize

    # Generation-aware VMEM budget: big tiles on v5e/v6e (128 MiB physical VMEM),
    # tighter cap on v7x (64 MiB per TC) so Mosaic's internal scratch isn't starved.
    vmem_cap = _tpu_vmem_capacity_bytes()
    if vmem_cap >= 100 * 1024 * 1024:            # v5e / v6e
        buf_budget = 16 * 1024 * 1024            # per double-buffered logits tile
    else:                                        # v7x
        buf_budget = 20 * 1024 * 1024
    vmem_limit_cap = 48 * 1024 * 1024

    if block_c is None:
        block_c = _pick_block(C, 2048, 128)
    if block_b is None:
        rows_budget = max(16, buf_budget // (block_c * itemsize))
        # Keep >= 2 batch blocks whenever B allows so the 'parallel' batch axis can be
        # sharded across both v7x TensorCores (harmless on single-TC chips).
        if B >= 16:
            rows_budget = min(rows_budget, max(8, B // 2))
        block_b = _pick_block(B, rows_budget, 8)

    assert B % block_b == 0 and C % block_c == 0, \
        "batch/class dims must be divisible by the chosen block sizes"
    assert block_b == B or block_b % 8 == 0
    assert block_c == C or block_c % 128 == 0

    gb = B // block_b
    gc = C // block_c

    # Hoisted gather: O(B) target logits extracted once in the wrapper (cheap XLA gather),
    # streamed as a (B,1) f32 input that stays resident over the class loop.
    t_idx = targets.astype(jnp.int32).reshape(B, 1)
    xt = jnp.take_along_axis(inputs, t_idx, axis=1).astype(jnp.float32)   # (B, 1)

    kernel = functools.partial(_ce_label_smooth_kernel,
                               epsilon=eps, num_classes=num_classes)

    tile_bytes = block_b * block_c * itemsize
    vmem_limit = int(min(vmem_limit_cap,
                         max(32 * 1024 * 1024, 4 * tile_bytes + (4 << 20))))

    partials = pl.pallas_call(
        kernel,
        out_shape=jax.ShapeDtypeStruct((gb, 1, 128), jnp.float32),
        grid_spec=pltpu.PrefetchScalarGridSpec(
            num_scalar_prefetch=0,
            grid=(gb, gc),
            in_specs=[
                pl.BlockSpec((block_b, block_c), lambda i, k: (i, k)),  # logits stream
                pl.BlockSpec((block_b, 1), lambda i, k: (i, 0)),        # xt (resident over k)
            ],
            out_specs=pl.BlockSpec((1, 1, 128), lambda i, k: (i, 0, 0)),
            scratch_shapes=[pltpu.VMEM((block_b, 1), jnp.float32)] * 3,
        ),
        compiler_params=pltpu.CompilerParams(
            dimension_semantics=("parallel", "arbitrary"),
            vmem_limit_bytes=vmem_limit,
        ),
        cost_estimate=pl.CostEstimate(
            flops=(4 if eps != 0.0 else 3) * B * C,
            transcendentals=B * C,
            bytes_accessed=B * C * itemsize + B * 4 + gb * 128 * 4,
        ),
    )(inputs, xt)

    # Tiny final reduction + mean over batch in the wrapper; keeping it here lets the
    # batch grid axis stay 'parallel' (both v7x TensorCores) instead of serial-accumulating.
    return jnp.sum(partials[:, 0, 0]) / B


def _reference(inputs, targets, num_classes, epsilon):
    # Pure-JAX reference mirroring the PyTorch module.
    log_probs = jax.nn.log_softmax(inputs.astype(jnp.float32), axis=1)
    onehot = jax.nn.one_hot(targets, num_classes, dtype=jnp.float32)
    sm = (1.0 - epsilon) * onehot + epsilon / num_classes
    return jnp.sum(jnp.mean(-sm * log_probs, axis=0))


if __name__ == "__main__":
    B = 64
    NUM_CLASSES = 256
    EPSILON = 0.05

    key = jax.random.PRNGKey(0)
    k1, k2 = jax.random.split(key)
    logits = jax.random.normal(k1, (B, NUM_CLASSES), dtype=jnp.float32)
    labels = jax.random.randint(k2, (B,), 0, NUM_CLASSES, dtype=jnp.int32)

    # Small explicit blocks so the (batch x class) grid, the online logsumexp and the
    # init/finalize accumulator paths are actually exercised: grid = (4, 2).
    loss = cross_entropy_label_smooth(logits, labels, num_classes=NUM_CLASSES,
                                      epsilon=EPSILON, block_b=16, block_c=128)
    loss = jax.block_until_ready(loss)
    ref = _reference(logits, labels, NUM_CLASSES, EPSILON)
    assert jnp.allclose(loss, ref, atol=1e-5, rtol=1e-5), (loss, ref)

    # label_smooth=False path: exercises the static eps==0 branch (sum-of-logits skipped).
    loss0 = cross_entropy_label_smooth(logits, labels, num_classes=NUM_CLASSES,
                                       epsilon=EPSILON, label_smooth=False,
                                       block_b=16, block_c=128)
    loss0 = jax.block_until_ready(loss0)
    ref0 = _reference(logits, labels, NUM_CLASSES, 0.0)
    assert jnp.allclose(loss0, ref0, atol=1e-5, rtol=1e-5), (loss0, ref0)

    # bf16 logits streamed directly (halves HBM bytes); upcast happens inside the kernel.
    logits_bf16 = logits.astype(jnp.bfloat16)
    loss_bf16 = cross_entropy_label_smooth(logits_bf16, labels, num_classes=NUM_CLASSES,
                                           epsilon=EPSILON, block_b=16, block_c=128)
    loss_bf16 = jax.block_until_ready(loss_bf16)
    ref_bf16 = _reference(logits_bf16.astype(jnp.float32), labels, NUM_CLASSES, EPSILON)
    assert jnp.allclose(loss_bf16, ref_bf16, atol=1e-3, rtol=1e-3), (loss_bf16, ref_bf16)

    # Auto block-picking path (generation-aware VMEM budget, >=2 batch blocks kept).
    loss_auto = cross_entropy_label_smooth(logits, labels, num_classes=NUM_CLASSES,
                                           epsilon=EPSILON)
    loss_auto = jax.block_until_ready(loss_auto)
    assert jnp.allclose(loss_auto, ref, atol=1e-5, rtol=1e-5), (loss_auto, ref)

    print("KERNEL_OK")
</pallas_src>

<mosaic_0001>
module attributes {stable_mosaic.version = 11 : i64} {
  func.func @_ce_label_smooth_kernel(%arg0: i32, %arg1: i32, %arg2: memref<16x128xf32, #tpu.memory_space<vmem>>, %arg3: memref<16x1xf32, #tpu.memory_space<vmem>>, %arg4: memref<1x1x128xf32, #tpu.memory_space<vmem>>, %arg5: memref<16x1xf32, #tpu.memory_space<vmem>>, %arg6: memref<16x1xf32, #tpu.memory_space<vmem>>, %arg7: memref<16x1xf32, #tpu.memory_space<vmem>>) attributes {dimension_semantics = [#tpu.dimension_semantics<parallel>, #tpu.dimension_semantics<arbitrary>], iteration_bounds = array<i64: 4, 2>, scalar_prefetch = 0 : i64, scratch_operands = 3 : i64, tpu.core_type = #tpu.core_type<tc>, window_params = [{transform_indices = @transform_0, window_bounds = array<i64: 16, 128>}, {transform_indices = @transform_1, window_bounds = array<i64: 16, 1>}, {transform_indices = @transform_2, window_bounds = array<i64: 1, 1, 128>}]} {
    %c0_i32 = arith.constant 0 : i32
    %0 = arith.cmpi eq, %arg1, %c0_i32 : i32
    %1 = arith.extui %0 : i1 to i32
    %c0_i32_0 = arith.constant 0 : i32
    %2 = arith.cmpi ne, %1, %c0_i32_0 : i32
    scf.if %2 {
      %cst_19 = arith.constant 0xFF800000 : f32
      %29 = vector.broadcast %cst_19 : f32 to vector<16x1xf32>
      %c0_20 = arith.constant 0 : index
      %c0_21 = arith.constant 0 : index
      %30 = vector.load %arg5[%c0_20, %c0_21] : memref<16x1xf32, #tpu.memory_space<vmem>>, vector<16x1xf32>
      tpu.vector_store %arg5[%c0_20, %c0_21], %29 {strides = array<i32>} : memref<16x1xf32, #tpu.memory_space<vmem>>, vector<16x1xf32>,
      %cst_22 = arith.constant 0.000000e+00 : f32
      %31 = vector.broadcast %cst_22 : f32 to vector<16x1xf32>
      %c0_23 = arith.constant 0 : index
      %c0_24 = arith.constant 0 : index
      %32 = vector.load %arg6[%c0_23, %c0_24] : memref<16x1xf32, #tpu.memory_space<vmem>>, vector<16x1xf32>
      tpu.vector_store %arg6[%c0_23, %c0_24], %31 {strides = array<i32>} : memref<16x1xf32, #tpu.memory_space<vmem>>, vector<16x1xf32>,
      %cst_25 = arith.constant 0.000000e+00 : f32
      %33 = vector.broadcast %cst_25 : f32 to vector<16x1xf32>
      %c0_26 = arith.constant 0 : index
      %c0_27 = arith.constant 0 : index
      %34 = vector.load %arg7[%c0_26, %c0_27] : memref<16x1xf32, #tpu.memory_space<vmem>>, vector<16x1xf32>
      tpu.vector_store %arg7[%c0_26, %c0_27], %33 {strides = array<i32>} : memref<16x1xf32, #tpu.memory_space<vmem>>, vector<16x1xf32>,
    } else {
    }
    %c0 = arith.constant 0 : index
    %c0_1 = arith.constant 0 : index
    %3 = vector.load %arg2[%c0, %c0_1] : memref<16x128xf32, #tpu.memory_space<vmem>>, vector<16x128xf32>
    %cst = arith.constant dense<0xFF800000> : vector<16xf32>
    %4 = vector.multi_reduction <maximumf>, %3, %cst [1] : vector<16x128xf32> to vector<16xf32>
    %5 = vector.shape_cast %4 : vector<16xf32> to vector<16x1xf32>
    %c0_2 = arith.constant 0 : index
    %c0_3 = arith.constant 0 : index
    %6 = vector.load %arg5[%c0_2, %c0_3] : memref<16x1xf32, #tpu.memory_space<vmem>>, vector<16x1xf32>
    %7 = arith.maximumf %6, %5 : vector<16x1xf32>
    %c0_4 = arith.constant 0 : index
    %c0_5 = arith.constant 0 : index
    %8 = vector.load %arg5[%c0_4, %c0_5] : memref<16x1xf32, #tpu.memory_space<vmem>>, vector<16x1xf32>
    %9 = arith.subf %8, %7 : vector<16x1xf32>
    %10 = math.exp %9 : vector<16x1xf32>
    %c0_6 = arith.constant 0 : index
    %c0_7 = arith.constant 0 : index
    %11 = vector.load %arg6[%c0_6, %c0_7] : memref<16x1xf32, #tpu.memory_space<vmem>>, vector<16x1xf32>
    %12 = arith.mulf %10, %11 : vector<16x1xf32>
    %13 = vector.broadcast %7 : vector<16x1xf32> to vector<16x128xf32>
    %14 = arith.subf %3, %13 : vector<16x128xf32>
    %15 = math.exp %14 : vector<16x128xf32>
    %cst_8 = arith.constant dense<0.000000e+00> : vector<16xf32>
    %16 = vector.multi_reduction <add>, %15, %cst_8 [1] : vector<16x128xf32> to vector<16xf32>
    %17 = vector.shape_cast %16 : vector<16xf32> to vector<16x1xf32>
    %18 = arith.addf %12, %17 : vector<16x1xf32>
    %c0_9 = arith.constant 0 : index
    %c0_10 = arith.constant 0 : index
    %19 = vector.load %arg6[%c0_9, %c0_10] : memref<16x1xf32, #tpu.memory_space<vmem>>, vector<16x1xf32>
    tpu.vector_store %arg6[%c0_9, %c0_10], %18 {strides = array<i32>} : memref<16x1xf32, #tpu.memory_space<vmem>>, vector<16x1xf32>,
    %c0_11 = arith.constant 0 : index
    %c0_12 = arith.constant 0 : index
    %20 = vector.load %arg5[%c0_11, %c0_12] : memref<16x1xf32, #tpu.memory_space<vmem>>, vector<16x1xf32>
    tpu.vector_store %arg5[%c0_11, %c0_12], %7 {strides = array<i32>} : memref<16x1xf32, #tpu.memory_space<vmem>>, vector<16x1xf32>,
    %c0_13 = arith.constant 0 : index
    %c0_14 = arith.constant 0 : index
    %21 = vector.load %arg7[%c0_13, %c0_14] : memref<16x1xf32, #tpu.memory_space<vmem>>, vector<16x1xf32>
    %cst_15 = arith.constant dense<0.000000e+00> : vector<16xf32>
    %22 = vector.multi_reduction <add>, %3, %cst_15 [1] : vector<16x128xf32> to vector<16xf32>
    %23 = vector.shape_cast %22 : vector<16xf32> to vector<16x1xf32>
    %24 = arith.addf %21, %23 : vector<16x1xf32>
    %c0_16 = arith.constant 0 : index
    %c0_17 = arith.constant 0 : index
    %25 = vector.load %arg7[%c0_16, %c0_17] : memref<16x1xf32, #tpu.memory_space<vmem>>, vector<16x1xf32>
    tpu.vector_store %arg7[%c0_16, %c0_17], %24 {strides = array<i32>} : memref<16x1xf32, #tpu.memory_space<vmem>>, vector<16x1xf32>,
    %c1_i32 = arith.constant 1 : i32
    %26 = arith.cmpi eq, %arg1, %c1_i32 : i32
    %27 = arith.extui %26 : i1 to i32
    %c0_i32_18 = arith.constant 0 : i32
    %28 = arith.cmpi ne, %27, %c0_i32_18 : i32
    scf.if %28 {
      %c0_19 = arith.constant 0 : index
      %c0_20 = arith.constant 0 : index
      %29 = vector.load %arg5[%c0_19, %c0_20] : memref<16x1xf32, #tpu.memory_space<vmem>>, vector<16x1xf32>
      %c0_21 = arith.constant 0 : index
      %c0_22 = arith.constant 0 : index
      %30 = vector.load %arg6[%c0_21, %c0_22] : memref<16x1xf32, #tpu.memory_space<vmem>>, vector<16x1xf32>
      %31 = math.log %30 : vector<16x1xf32>
      %32 = arith.addf %29, %31 : vector<16x1xf32>
      %c0_23 = arith.constant 0 : index
      %c0_24 = arith.constant 0 : index
      %33 = vector.load %arg3[%c0_23, %c0_24] : memref<16x1xf32, #tpu.memory_space<vmem>>, vector<16x1xf32>
      %34 = arith.subf %33, %32 : vector<16x1xf32>
      %cst_25 = arith.constant -0.949999988 : f32
      %35 = vector.broadcast %cst_25 : f32 to vector<16x1xf32>
      %36 = arith.mulf %35, %34 : vector<16x1xf32>
      %c0_26 = arith.constant 0 : index
      %c0_27 = arith.constant 0 : index
      %37 = vector.load %arg7[%c0_26, %c0_27] : memref<16x1xf32, #tpu.memory_space<vmem>>, vector<16x1xf32>
      %cst_28 = arith.constant 2.560000e+02 : f32
      %38 = vector.broadcast %cst_28 : f32 to vector<16x1xf32>
      %39 = arith.mulf %38, %32 : vector<16x1xf32>
      %40 = arith.subf %37, %39 : vector<16x1xf32>
      %cst_29 = arith.constant 1.95312503E-4 : f32
      %41 = vector.broadcast %cst_29 : f32 to vector<16x1xf32>
      %42 = arith.mulf %41, %40 : vector<16x1xf32>
      %43 = arith.subf %36, %42 : vector<16x1xf32>
      %44 = vector.shape_cast %43 : vector<16x1xf32> to vector<1x16x1xf32>
      %cst_30 = arith.constant dense<0.000000e+00> : vector<1xf32>
      %45 = vector.multi_reduction <add>, %44, %cst_30 [1, 2] : vector<1x16x1xf32> to vector<1xf32>
      %46 = vector.shape_cast %45 : vector<1xf32> to vector<1x1x1xf32>
      %47 = vector.extract %46[0, 0, 0] : f32 from vector<1x1x1xf32>
      %48 = vector.broadcast %47 : f32 to vector<1x1x128xf32>
      %c0_31 = arith.constant 0 : index
      %c0_32 = arith.constant 0 : index
      %c0_33 = arith.constant 0 : index
      %49 = vector.load %arg4[%c0_31, %c0_32, %c0_33] : memref<1x1x128xf32, #tpu.memory_space<vmem>>, vector<1x1x128xf32>
      tpu.vector_store %arg4[%c0_31, %c0_32, %c0_33], %48 {strides = array<i32>} : memref<1x1x128xf32, #tpu.memory_space<vmem>>, vector<1x1x128xf32>,
    } else {
    }
    return
  }
  func.func @transform_0(%arg0: i32, %arg1: i32) -> (i32, i32) {
    %c0_i32 = arith.constant 0 : i32
    return %arg0, %arg1 : i32, i32
  }
  func.func @transform_1(%arg0: i32, %arg1: i32) -> (i32, i32) {
    %c0_i32 = arith.constant 0 : i32
    %c0_i32_0 = arith.constant 0 : i32
    return %arg0, %c0_i32 : i32, i32
  }
  func.func @transform_2(%arg0: i32, %arg1: i32) -> (i32, i32, i32) {
    %c0_i32 = arith.constant 0 : i32
    %c0_i32_0 = arith.constant 0 : i32
    %c0_i32_1 = arith.constant 0 : i32
    return %arg0, %c0_i32, %c0_i32_0 : i32, i32, i32
  }
}

</mosaic_0001>

<llo_original>
// kernel: tpu_custom_call.1
$region0: #{tpu_custom_call.1}
  #allocation0 [shape = 'u32[]', space=smem, size = 0x4, offset = 0x4, fixed_abs, tag = 'smem constant byte address 0x4 - core index']
  #allocation1 [shape = 'u32[144,128]{1,0:T(1,128)}', space=vmem, size = 0x12000, scoped, tag = 'internal scratch']
  #allocation2 [shape = 'f32[16,1]{1,0:T(8,128)}', space=vmem, size = 0x2000, scoped, tag = 'scratch operand']
  #allocation3 [shape = 'f32[16,1]{1,0:T(8,128)}', space=vmem, size = 0x2000, scoped, tag = 'scratch operand']
  #allocation4 [shape = 'f32[16,1]{1,0:T(8,128)}', space=vmem, size = 0x2000, scoped, tag = 'scratch operand']
  %s0 = inlined_call_operand.hbm [shape: f32[64,256], index: 0, kind: input, shape index: {}]
  %s1 = inlined_call_operand.vmem [shape: f32[64,1], index: 1, kind: input, shape index: {}]
  %s2 = inlined_call_operand.hbm [shape: f32[4,1,128], index: 2, kind: output, shape index: {}]
  %s3 = sld [smem:[#allocation0]]
  $region53: #{tpu_custom_call.1} parent=0
    _
  %s5 = ssub.s32 1, %s3
  %s6 = scalar_select 0, %s5, %s3
  $region1: #{tpu_custom_call.1} parent=0
    #allocation5 [shape = 'u8[16384]{0}', space=vmem, size = 0x4000, scoped, tag = 'input window, operand 0']
    #allocation6 [shape = 's32[2]{0}', space=sflag, size = 0x8, scoped, tag = 'scoped memory for tpu_custom_call.1']
    #allocation7 [shape = 's32[2]{0}', space=sflag, size = 0x8, scoped, tag = 'scoped memory for tpu_custom_call.1']
    #allocation8 [shape = 'u8[1024]{0}', space=vmem, size = 0x400, scoped, tag = 'output window, operand 0']
    %7 = vsyncpa [#allocation6], 0
    %s8 = scalar_lea.sflag [#allocation6], 1
    %9 = vsyncpa %s8, 0
    %10 = vsyncpa [#allocation7], 0
    %s11 = scalar_lea.sflag [#allocation7], 1
    %12 = vsyncpa %s11, 0
    loop: start=0, step=1, limit=10
    $region2: #{tpu_custom_call.1} parent=1 // loop_pre_header
      _
    $region3: #{tpu_custom_call.1} parent=1 // loop_header
      %s14 = sphi 0, %s18
      %p15 = scmp.ge.s32.totalorder %s14, 10
      %s21 = sphi 0, %s33
      %s22 = sphi 0, %s29
      %s23 = sphi 0, %s21
      %s24 = sphi 0, %s22
      %s25 = sphi 0, %s23
      %s26 = sphi 0, %s24
      %s38 = sphi 0, %s40
      %s41 = sphi 0, %s38
      %s42 = sphi 0, %s41
      %s58 = sphi 0, %s42
      %s64 = sphi 0, %s66
      %s67 = sphi 0, %s64
      %s68 = sphi 0, %s67
      %s84 = sphi 0, %s68
      %s90 = sphi 0, %s92
      %s93 = sphi 0, %s90
      %s94 = sphi 0, %s93
      %s110 = sphi 0, %s94
    $region4: #{tpu_custom_call.1} parent=1 // loop_header_branch
      %17 = sbr.rel (%p15) target = $region8
    $region5: #{tpu_custom_call.1} parent=1 // loop_body
      %s19 = ssub.s32 %s14, 1
      %s20 = ssub.s32 %s14, 2
      %s27 = sadd.s32 1, %s22
      %p28 = scmp.ge.s32.totalorder %s27, 2
      %s29 = scalar_select %p28, 0, %s27
      %s30 = sadd.s32 1, %s21
      %s31 = scalar_select %p28, %s30, %s21
      %p32 = scmp.ge.s32.totalorder %s31, 4
      %s33 = scalar_select %p32, 0, %s31
      %s34 = ssub.s32 %s21, %s33
      %s35 = ssub.s32 %s22, %s29
      %s36 = sor.u32 %s34, %s35
      %p37 = scmp.eq.s32.totalorder %s36, 0
      %s39 = sadd.s32 %s38, 1
      %s40 = scalar_select %p37, %s38, %s39
      %p43 = pneg %p37
      %p44 = scmp.eq.s32.totalorder %s14, 7
      %p45 = por %p43, %p44
      %p46 = scmp.ne.s32.totalorder %s38, %s41
      %p47 = scmp.eq.s32.totalorder %s14, 0
      %p48 = por %p46, %p47
      %p49 = scmp.ne.s32.totalorder %s38, %s41
      %p50 = scmp.eq.s32.totalorder %s19, 7
      %p51 = por %p49, %p50
      %p52 = scmp.ne.s32.totalorder %s41, %s42
      %p53 = scmp.eq.s32.totalorder %s19, 0
      %p54 = por %p52, %p53
      %p55 = scmp.ne.s32.totalorder %s41, %s42
      %p56 = scmp.eq.s32.totalorder %s20, 7
      %p57 = por %p55, %p56
      %p59 = scmp.ne.s32.totalorder %s42, %s58
      %p60 = scmp.eq.s32.totalorder %s20, 0
      %p61 = por %p59, %p60
      %s62 = ssub.s32 %s21, %s33
      %p63 = scmp.eq.s32.totalorder %s62, 0
      %s65 = sadd.s32 %s64, 1
      %s66 = scalar_select %p63, %s64, %s65
      %p69 = pneg %p63
      %p70 = scmp.eq.s32.totalorder %s14, 7
      %p71 = por %p69, %p70
      %p72 = scmp.ne.s32.totalorder %s64, %s67
      %p73 = scmp.eq.s32.totalorder %s14, 0
      %p74 = por %p72, %p73
      %p75 = scmp.ne.s32.totalorder %s64, %s67
      %p76 = scmp.eq.s32.totalorder %s19, 7
      %p77 = por %p75, %p76
      %p78 = scmp.ne.s32.totalorder %s67, %s68
      %p79 = scmp.eq.s32.totalorder %s19, 0
      %p80 = por %p78, %p79
      %p81 = scmp.ne.s32.totalorder %s67, %s68
      %p82 = scmp.eq.s32.totalorder %s20, 7
      %p83 = por %p81, %p82
      %p85 = scmp.ne.s32.totalorder %s68, %s84
      %p86 = scmp.eq.s32.totalorder %s20, 0
      %p87 = por %p85, %p86
      %s88 = ssub.s32 %s21, %s33
      %p89 = scmp.eq.s32.totalorder %s88, 0
      %s91 = sadd.s32 %s90, 1
      %s92 = scalar_select %p89, %s90, %s91
      %p95 = pneg %p89
      %p96 = scmp.eq.s32.totalorder %s14, 7
      %p97 = por %p95, %p96
      %p98 = scmp.ne.s32.totalorder %s90, %s93
      %p99 = scmp.eq.s32.totalorder %s14, 0
      %p100 = por %p98, %p99
      %p101 = scmp.ne.s32.totalorder %s90, %s93
      %p102 = scmp.eq.s32.totalorder %s19, 7
      %p103 = por %p101, %p102
      %p104 = scmp.ne.s32.totalorder %s93, %s94
      %p105 = scmp.eq.s32.totalorder %s19, 0
      %p106 = por %p104, %p105
      %p107 = scmp.ne.s32.totalorder %s93, %s94
      %p108 = scmp.eq.s32.totalorder %s20, 7
      %p109 = por %p107, %p108
      %p111 = scmp.ne.s32.totalorder %s94, %s110
      %p112 = scmp.eq.s32.totalorder %s20, 0
      %p113 = por %p111, %p112
      %p114 = scmp.le.s32.totalorder 1, %s14
      %p115 = scmp.lt.s32.totalorder %s14, 9
      %p116 = pnand %p114, %p115
      %p117 = pneg %p116
      // Predicated region
      $region9: #{tpu_custom_call.1} parent=5 // pred_check
        _
      $region10: #{tpu_custom_call.1} parent=5 // pred_check_branch
        %119 = sbr.rel (%p116) target = $region12
      $region11: #{tpu_custom_call.1} parent=5 // pred_region
        %s120 = ssub.s32 %s14, 1
      $region12: #{tpu_custom_call.1} parent=5 // pred_fallthru
        _
      %p121 = scmp.lt.s32.totalorder %s14, 8
      // Predicated region
      $region13: #{tpu_custom_call.1} parent=5 // pred_check
        %p122 = pneg %p121
      $region14: #{tpu_custom_call.1} parent=5 // pred_check_branch
        %124 = sbr.rel (%p122) target = $region16
      $region15: #{tpu_custom_call.1} parent=5 // pred_region
        // Predicated region
        $region17: #{tpu_custom_call.1} parent=15 // pred_check
          %p125 = pneg %p48
        $region18: #{tpu_custom_call.1} parent=15 // pred_check_branch
          %127 = sbr.rel (%p125) target = $region20
        $region19: #{tpu_custom_call.1} parent=15 // pred_region
          %s128 = sand.u32 %s38, 1
          %s129 = scalar_lea.sflag [#allocation6], %s128
          %s130 = sand.u32 %s38, 1
          %s131 = smul.addr %s130, 16
          %s132 = scalar_lea.vmem [#allocation5], %s131
          %s133 = smul.u32 2, %s21
          %s135 = ssub.s32 256, 256
          %136 = vsyncadd %s129, %s135
          %s137 = smul.addr %s133, 2
          %s138 = sadd.s32 %s22, %s137
          %s139 = smul.addr %s138, 128
          %s140 = scalar_lea.hbm %s0, %s139
          %s141 = sshll.u32 %s132, 4
          %s142 = int_to_ptr.vmem [resolvable:$true] %s141
          %147 = dma.hbm_to_vmem [thread:$0]  %s140, 256, %s142, %s129, 256, 128, 8
        $region20: #{tpu_custom_call.1} parent=15 // pred_fallthru
          _
        // Predicated region
        $region21: #{tpu_custom_call.1} parent=15 // pred_check
          %p148 = pneg %p74
        $region22: #{tpu_custom_call.1} parent=15 // pred_check_branch
          %150 = sbr.rel (%p148) target = $region24
        $region23: #{tpu_custom_call.1} parent=15 // pred_region
          %s151 = smul.u32 2, %s21
          %p152 = scmp.lt.s32.totalorder %s151, 7
          %s153 = scalar_select %p152, %s151, 7
          %s154 = smul.addr %s153, 8
          %s155 = scalar_lea.vmem %s1, %s154
          %s156 = smul.u32 2, %s21
        $region24: #{tpu_custom_call.1} parent=15 // pred_fallthru
          _
      $region16: #{tpu_custom_call.1} parent=5 // pred_fallthru
        _
      %p157 = scmp.le.s32.totalorder 1, %s14
      %p158 = scmp.lt.s32.totalorder %s14, 9
      %p159 = pnand %p157, %p158
      %p160 = pneg %p159
      // Predicated region
      $region25: #{tpu_custom_call.1} parent=5 // pred_check
        _
      $region26: #{tpu_custom_call.1} parent=5 // pred_check_branch
        %162 = sbr.rel (%p159) target = $region28
      $region27: #{tpu_custom_call.1} parent=5 // pred_region
        %s163 = ssub.s32 %s14, 1
        %s164 = sand.u32 %s41, 1
        %s165 = scalar_lea.sflag [#allocation6], %s164
        %s166 = sand.u32 %s41, 1
        %s167 = smul.addr %s166, 16
        %s168 = scalar_lea.vmem [#allocation5], %s167
        // Predicated region
        $region29: #{tpu_custom_call.1} parent=27 // pred_check
          %p169 = pneg %p54
        $region30: #{tpu_custom_call.1} parent=27 // pred_check_branch
          %171 = sbr.rel (%p169) target = $region32
        $region31: #{tpu_custom_call.1} parent=27 // pred_region
          %172 = dma.done %s165, 256
        $region32: #{tpu_custom_call.1} parent=27 // pred_fallthru
          _
        %s173 = sand.u32 %s41, 1
        %s174 = scalar_lea.sflag [#allocation6], %s173
        %s175 = sand.u32 %s41, 1
        %s176 = smul.addr %s175, 16
        %s177 = scalar_lea.vmem [#allocation5], %s176
        %p178 = pneg %p54
        %p179 = pneg %p51
        %s180 = smul.u32 2, %s23
        %p181 = scmp.lt.s32.totalorder %s180, 7
        %s182 = scalar_select %p181, %s180, 7
        %s183 = smul.addr %s182, 8
        %s184 = scalar_lea.vmem %s1, %s183
        %p185 = pneg %p80
        %p186 = pneg %p77
        %p187 = pneg %p106
        %p188 = pneg %p103
        %s189 = sand.u32 %s93, 1
        %s190 = scalar_lea.sflag [#allocation7], %s189
        %s191 = sand.u32 %s93, 1
        %s192 = scalar_lea.vmem [#allocation8], %s191
        %s193 = smul.u32 2, %s23
        %s194 = smul.u32 2, %s23
        %p195 = scmp.lt.s32.totalorder %s194, 7
        %s196 = scalar_select %p195, %s194, 7
        %s197 = smul.addr %s196, 8
        %s198 = scalar_lea.vmem %s1, %s197
        %s199 = smul.u32 2, %s23
        %p200 = scmp.eq.s32.totalorder %s24, 0
        // Predicated region
        $region33: #{tpu_custom_call.1} parent=27 // pred_check
          %p201 = pneg %p200
        $region34: #{tpu_custom_call.1} parent=27 // pred_check_branch
          %203 = sbr.rel (%p201) target = $region36
        $region35: #{tpu_custom_call.1} parent=27 // pred_region
          %vm204 = vcmask 7168
          %205 = vst.msk [vmem:[#allocation2] sm:$0xff] %vm204, -inf
          %206 = vst.msk [vmem:[#allocation2 + $0x8] sm:$0xff] %vm204, -inf
          %207 = vst.msk [vmem:[#allocation3] sm:$0xff] %vm204, 0.0
          %208 = vst.msk [vmem:[#allocation3 + $0x8] sm:$0xff] %vm204, 0.0
          %209 = vst.msk [vmem:[#allocation4] sm:$0xff] %vm204, 0.0
          %210 = vst.msk [vmem:[#allocation4 + $0x8] sm:$0xff] %vm204, 0.0
        $region36: #{tpu_custom_call.1} parent=27 // pred_fallthru
          _
        %v211 = vld [vmem:[%s168] sm:$0xff]
        %v212 = vld [vmem:[%s168 + $0x8] sm:$0xff]
        %213 = vmax.xlane.f32.xlu0 %v211
        %v214 = vpop.xlane.xlu0 %213
        %215 = vmax.xlane.f32.xlu0 %v212
        %v216 = vpop.xlane.xlu0 %215
        %v217 = vld [vmem:[#allocation2] sm:$0xff]
        %v218 = vld [vmem:[#allocation2 + $0x8] sm:$0xff]
        %v219 = vmax.f32 %v217, %v214
        %v220 = vmax.f32 %v218, %v216
        %v221 = vsub.f32 %v217, %v219
        %v222 = vsub.f32 %v218, %v220
        %v223 = vmul.f32 %v221, 1.442695
        %v224 = vpow.pop %v223
        %v225 = vmul.f32 %v222, 1.442695
        %v226 = vpow.pop %v225
        %v227 = vld [vmem:[#allocation3] sm:$0xff]
        %v228 = vld [vmem:[#allocation3 + $0x8] sm:$0xff]
        %v229 = vmul.f32 %v224, %v227
        %v230 = vmul.f32 %v226, %v228
        %232 = vset.pattern.permute.xlu0 0
        %233 = vperm.xlu0 %232, %v219
        %v234 = vpop.permute.xlu0 %233
        %237 = vset.pattern.permute.xlu0 0
        %238 = vperm.xlu0 %237, %v220
        %v239 = vpop.permute.xlu0 %238
        %v241 = vsub.f32 %v211, %v234
        %v242 = vsub.f32 %v212, %v239
        %v243 = vmul.f32 %v241, 1.442695
        %v244 = vpow.pop %v243
        %v245 = vmul.f32 %v242, 1.442695
        %v246 = vpow.pop %v245
        %247 = vadd.xlane.f32.xlu0 %v244
        %v248 = vpop.xlane.xlu0 %247
        %249 = vadd.xlane.f32.xlu0 %v246
        %v250 = vpop.xlane.xlu0 %249
        %v251 = vadd.f32 %v229, %v248
        %v252 = vadd.f32 %v230, %v250
        %vm253 = vcmask 7168
        %254 = vst.msk [vmem:[#allocation3] sm:$0xff] %vm253, %v251
        %255 = vst.msk [vmem:[#allocation3 + $0x8] sm:$0xff] %vm253, %v252
        %256 = vst.msk [vmem:[#allocation2] sm:$0xff] %vm253, %v219
        %257 = vst.msk [vmem:[#allocation2 + $0x8] sm:$0xff] %vm253, %v220
        %v258 = vld [vmem:[#allocation4] sm:$0xff]
        %v259 = vld [vmem:[#allocation4 + $0x8] sm:$0xff]
        %260 = vadd.xlane.f32.xlu0 %v211
        %v261 = vpop.xlane.xlu0 %260
        %262 = vadd.xlane.f32.xlu0 %v212
        %v263 = vpop.xlane.xlu0 %262
        %v264 = vadd.f32 %v258, %v261
        %v265 = vadd.f32 %v259, %v263
        %266 = vst.msk [vmem:[#allocation4] sm:$0xff] %vm253, %v264
        %267 = vst.msk [vmem:[#allocation4 + $0x8] sm:$0xff] %vm253, %v265
        %p268 = scmp.eq.s32.totalorder %s24, 1
        // Predicated region
        $region37: #{tpu_custom_call.1} parent=27 // pred_check
          %p269 = pneg %p268
        $region38: #{tpu_custom_call.1} parent=27 // pred_check_branch
          %271 = sbr.rel (%p269) target = $region40
        $region39: #{tpu_custom_call.1} parent=27 // pred_region
          %v272 = vld [vmem:[#allocation2] sm:$0xff]
          %v273 = vld [vmem:[#allocation2 + $0x8] sm:$0xff]
          %v274 = vld [vmem:[#allocation3] sm:$0xff]
          %v275 = vld [vmem:[#allocation3 + $0x8] sm:$0xff]
          %v276 = vlog2.pop %v274
          %v277 = vmul.f32 %v276, 0.6931472
          %v278 = vlog2.pop %v275
          %v279 = vmul.f32 %v278, 0.6931472
          %v280 = vadd.f32 %v272, %v277
          %v281 = vadd.f32 %v273, %v279
          %v282 = vld [vmem:[%s198] sm:$0xff]
          %v283 = vld [vmem:[%s198 + $0x8] sm:$0xff]
          %v284 = vsub.f32 %v282, %v280
          %v285 = vsub.f32 %v283, %v281
          %v286 = vmul.f32 %v284, -0.95
          %v287 = vmul.f32 %v285, -0.95
          %v288 = vld [vmem:[#allocation4] sm:$0xff]
          %v289 = vld [vmem:[#allocation4 + $0x8] sm:$0xff]
          %v290 = vmul.f32 %v280, 256.0
          %v291 = vmul.f32 %v281, 256.0
          %v292 = vsub.f32 %v288, %v290
          %v293 = vsub.f32 %v289, %v291
          %v294 = vmul.f32 %v292, 0.0001953125
          %v295 = vmul.f32 %v293, 0.0001953125
          %v296 = vsub.f32 %v286, %v294
          %v297 = vsub.f32 %v287, %v295
          %v298 = vsel %vm253, %v296, 0.0
          %v299 = vsel %vm253, %v297, 0.0
          %v300 = vadd.f32 %v298, %v299
          %301 = vadd.xlane.f32.xlu0 %v300
          %v302 = vpop.xlane.xlu0 %301
          %v303 = vrot.slane %v302, 4
          %v304 = vadd.f32 %v302, %v303
          %v305 = vrot.slane %v304, 2
          %v306 = vadd.f32 %v304, %v305
          %v307 = vrot.slane %v306, 1
          %v308 = vadd.f32 %v306, %v307
          %s309 = vtos %v308
          %v310 = vstv %s309
          %311 = vst [vmem:[%s192] sm:$0x1] %v310
        $region40: #{tpu_custom_call.1} parent=27 // pred_fallthru
          _
        %s312 = sand.u32 %s93, 1
        %s313 = scalar_lea.sflag [#allocation7], %s312
        %s314 = sand.u32 %s93, 1
        %s315 = scalar_lea.vmem [#allocation8], %s314
        // Predicated region
        $region41: #{tpu_custom_call.1} parent=27 // pred_check
          %p316 = pneg %p103
        $region42: #{tpu_custom_call.1} parent=27 // pred_check_branch
          %318 = sbr.rel (%p316) target = $region44
        $region43: #{tpu_custom_call.1} parent=27 // pred_region
          %s320 = ssub.s32 16, 16
          %321 = vsyncadd %s313, %s320
          %s322 = smul.addr %s23, 16
          %s323 = scalar_lea.hbm %s2, %s322
          %s325 = sshll.u32 %s315, 4
          %s326 = int_to_ptr.vmem [resolvable:$true] %s325
          %328 = dma.vmem_to_hbm [thread:$0]  %s326, 16, %s323, %s313
        $region44: #{tpu_custom_call.1} parent=27 // pred_fallthru
          _
      $region28: #{tpu_custom_call.1} parent=5 // pred_fallthru
        _
      %p329 = scmp.le.s32.totalorder 2, %s14
      // Predicated region
      $region45: #{tpu_custom_call.1} parent=5 // pred_check
        %p330 = pneg %p329
      $region46: #{tpu_custom_call.1} parent=5 // pred_check_branch
        %332 = sbr.rel (%p330) target = $region48
      $region47: #{tpu_custom_call.1} parent=5 // pred_region
        %s333 = ssub.s32 %s14, 2
        // Predicated region
        $region49: #{tpu_custom_call.1} parent=47 // pred_check
          %p334 = pneg %p109
        $region50: #{tpu_custom_call.1} parent=47 // pred_check_branch
          %336 = sbr.rel (%p334) target = $region52
        $region51: #{tpu_custom_call.1} parent=47 // pred_region
          %s337 = sand.u32 %s94, 1
          %s338 = scalar_lea.sflag [#allocation7], %s337
          %s339 = sand.u32 %s94, 1
          %s340 = scalar_lea.vmem [#allocation8], %s339
          %341 = dma.done %s338, 16
        $region52: #{tpu_custom_call.1} parent=47 // pred_fallthru
          _
      $region48: #{tpu_custom_call.1} parent=5 // pred_fallthru
        _
    $region6: #{tpu_custom_call.1} parent=1 // loop_footer
      %s18 = sadd.s32 1, %s14
    $region7: #{tpu_custom_call.1} parent=1 // loop_footer_branch
      %13 = sbr.rel target = $region3
    $region8: #{tpu_custom_call.1} parent=1 // loop_exit
      _
    %342 = vsyncpa [#allocation6], 1
    %s343 = scalar_lea.sflag [#allocation6], 1
    %344 = vsyncpa %s343, 1
    %345 = vsyncpa [#allocation7], 1
    %s346 = scalar_lea.sflag [#allocation7], 1
    %347 = vsyncpa %s346, 1

</llo_original>
